<compile_context>
chip_gen: v6e
topology: v6e:2x2x1
jax: 0.10.0
libtpu: 0.0.40
codegen_flags: <defaults>
</compile_context>

<pallas_src>
import functools
import math

import jax
import jax.numpy as jnp
from jax.experimental import pallas as pl
from jax.experimental.pallas import tpu as pltpu


# ----------------------------------------------------------------------------
# Parameter ("buffer") setup: deterministic, mirrors the PyTorch __init__.
# ----------------------------------------------------------------------------
def make_positional_encoding_buffer(d_model: int, max_len: int = 500) -> jnp.ndarray:
    position = jnp.arange(max_len, dtype=jnp.float32)[:, None]            # (max_len, 1)
    div_term = jnp.exp(
        jnp.arange(0, d_model, 2, dtype=jnp.float32)
        * -(math.log(10000.0) / d_model)
    )                                                                      # (d_model/2,)
    pe = jnp.zeros((max_len, 1, d_model), dtype=jnp.float32)
    pe = pe.at[:, 0, 0::2].set(jnp.sin(position * div_term))
    pe = pe.at[:, 0, 1::2].set(jnp.cos(position * div_term))
    return pe                                                              # (max_len, 1, d_model)


# ----------------------------------------------------------------------------
# Pallas kernels (lane-dense 2-D view: x block (TS, B*D), pe block (TS, D)).
# ----------------------------------------------------------------------------
def _pe_add_kernel(x_ref, pe_ref, o_ref, *, batch: int):
    pe_row = pe_ref[...].astype(jnp.float32)                               # (TS, D)
    pe_full = jnp.tile(pe_row, (1, batch)) if batch > 1 else pe_row        # (TS, B*D)
    y = x_ref[...].astype(jnp.float32) + pe_full
    o_ref[...] = y.astype(o_ref.dtype)


def _pe_add_dropout_kernel(x_ref, pe_ref, u_ref, o_ref, *, batch: int, dropout_p: float):
    pe_row = pe_ref[...].astype(jnp.float32)                               # (TS, D)
    pe_full = jnp.tile(pe_row, (1, batch)) if batch > 1 else pe_row        # (TS, B*D)
    y = x_ref[...].astype(jnp.float32) + pe_full
    # Inverted dropout: keep with prob (1 - p), scale kept values by 1/(1 - p).
    keep = u_ref[...] >= jnp.float32(dropout_p)
    y = jnp.where(keep, y * jnp.float32(1.0 / (1.0 - dropout_p)), jnp.float32(0.0))
    o_ref[...] = y.astype(o_ref.dtype)


def _choose_tile_rows(seq_len: int, row_bytes: int, target_bytes: int = 2 * 1024 * 1024) -> int:
    """Pick a seq-tile so one block is ~2 MiB (multiple of 8, or the full seq)."""
    ts = (target_bytes // max(row_bytes, 1)) // 8 * 8
    ts = max(8, ts)
    return seq_len if ts >= seq_len else ts


# ----------------------------------------------------------------------------
# Wrapper
# ----------------------------------------------------------------------------
def positional_encoding_forward(
    x: jnp.ndarray,
    pe: jnp.ndarray,
    *,
    dropout_p: float = 0.1,
    training: bool = False,
    rng_key=None,
) -> jnp.ndarray:
    """x: (seq_len, batch, d_model); pe: (max_len, 1, d_model)."""
    S, B, D = x.shape
    BD = B * D

    # Free, layout-compatible reshape to a lane-dense 2-D slab.
    x2d = x.reshape(S, BD)
    pe_s = pe[:S, 0, :]                                                    # (S, D)

    TS = _choose_tile_rows(S, BD * jnp.dtype(x.dtype).itemsize)
    grid = (pl.cdiv(S, TS),)

    x_spec = pl.BlockSpec((TS, BD), lambda i: (i, 0))
    pe_spec = pl.BlockSpec((TS, D), lambda i: (i, 0))
    out_spec = pl.BlockSpec((TS, BD), lambda i: (i, 0))

    compiler_params = pltpu.CompilerParams(dimension_semantics=("parallel",))

    if training and dropout_p > 0.0:
        if not (0.0 <= dropout_p < 1.0):
            raise ValueError("dropout_p must be in [0, 1) for training mode")
        if rng_key is None:
            rng_key = jax.random.PRNGKey(0)
        u = jax.random.uniform(rng_key, (S, BD), dtype=jnp.float32)
        kernel = functools.partial(
            _pe_add_dropout_kernel, batch=B, dropout_p=float(dropout_p)
        )
        out2d = pl.pallas_call(
            kernel,
            out_shape=jax.ShapeDtypeStruct((S, BD), x.dtype),
            grid=grid,
            in_specs=[x_spec, pe_spec, pl.BlockSpec((TS, BD), lambda i: (i, 0))],
            out_specs=out_spec,
            compiler_params=compiler_params,
        )(x2d, pe_s, u)
    else:
        kernel = functools.partial(_pe_add_kernel, batch=B)
        out2d = pl.pallas_call(
            kernel,
            out_shape=jax.ShapeDtypeStruct((S, BD), x.dtype),
            grid=grid,
            in_specs=[x_spec, pe_spec],
            out_specs=out_spec,
            compiler_params=compiler_params,
        )(x2d, pe_s)

    return out2d.reshape(S, B, D)


# ----------------------------------------------------------------------------
# Demo / correctness check
# ----------------------------------------------------------------------------
if __name__ == "__main__":
    d_model = 32
    seq_len = 8
    batch = 2
    max_len = 500
    dropout_p = 0.1

    key = jax.random.PRNGKey(0)
    x = jax.random.normal(key, (seq_len, batch, d_model), dtype=jnp.float32)
    pe = make_positional_encoding_buffer(d_model, max_len)

    # Eval-mode forward (dropout is identity in eval, exactly like nn.Dropout).
    out = positional_encoding_forward(x, pe, dropout_p=dropout_p, training=False)
    out = jax.block_until_ready(out)

    ref = x + pe[:seq_len]                                                  # (S, B, D)
    assert out.shape == (seq_len, batch, d_model)
    assert jnp.allclose(out, ref, atol=1e-6, rtol=1e-6), "eval mismatch vs reference"

    # Training-mode forward: every element must be either dropped (0) or the
    # reference value scaled by 1/(1-p).
    out_train = positional_encoding_forward(
        x, pe, dropout_p=dropout_p, training=True, rng_key=jax.random.PRNGKey(123)
    )
    out_train = jax.block_until_ready(out_train)
    scale = 1.0 / (1.0 - dropout_p)
    ok = jnp.isclose(out_train, ref * scale, atol=1e-5) | (out_train == 0.0)
    assert bool(jnp.all(ok)), "training-mode dropout values inconsistent"

    print("KERNEL_OK")
</pallas_src>

<mosaic_0001>
module attributes {stable_mosaic.version = 11 : i64} {
  func.func @_pe_add_kernel(%arg0: i32, %arg1: memref<8x64xf32, #tpu.memory_space<vmem>>, %arg2: memref<8x32xf32, #tpu.memory_space<vmem>>, %arg3: memref<8x64xf32, #tpu.memory_space<vmem>>) attributes {dimension_semantics = [#tpu.dimension_semantics<parallel>], iteration_bounds = array<i64: 1>, scalar_prefetch = 0 : i64, scratch_operands = 0 : i64, tpu.core_type = #tpu.core_type<tc>, window_params = [{transform_indices = @transform_0, window_bounds = array<i64: 8, 64>}, {transform_indices = @transform_1, window_bounds = array<i64: 8, 32>}, {transform_indices = @transform_2, window_bounds = array<i64: 8, 64>}]} {
    %c0 = arith.constant 0 : index
    %c0_0 = arith.constant 0 : index
    %0 = vector.load %arg2[%c0, %c0_0] : memref<8x32xf32, #tpu.memory_space<vmem>>, vector<8x32xf32>
    %1 = tpu.concatenate %0, %0 in 1 : vector<8x32xf32>, vector<8x32xf32> -> vector<8x64xf32>
    %c0_1 = arith.constant 0 : index
    %c0_2 = arith.constant 0 : index
    %2 = vector.load %arg1[%c0_1, %c0_2] : memref<8x64xf32, #tpu.memory_space<vmem>>, vector<8x64xf32>
    %3 = arith.addf %2, %1 : vector<8x64xf32>
    %c0_3 = arith.constant 0 : index
    %c0_4 = arith.constant 0 : index
    %4 = vector.load %arg3[%c0_3, %c0_4] : memref<8x64xf32, #tpu.memory_space<vmem>>, vector<8x64xf32>
    tpu.vector_store %arg3[%c0_3, %c0_4], %3 {strides = array<i32>} : memref<8x64xf32, #tpu.memory_space<vmem>>, vector<8x64xf32>,
    return
  }
  func.func @transform_0(%arg0: i32) -> (i32, i32) {
    %c0_i32 = arith.constant 0 : i32
    %c0_i32_0 = arith.constant 0 : i32
    return %arg0, %c0_i32 : i32, i32
  }
  func.func @transform_1(%arg0: i32) -> (i32, i32) {
    %c0_i32 = arith.constant 0 : i32
    %c0_i32_0 = arith.constant 0 : i32
    return %arg0, %c0_i32 : i32, i32
  }
  func.func @transform_2(%arg0: i32) -> (i32, i32) {
    %c0_i32 = arith.constant 0 : i32
    %c0_i32_0 = arith.constant 0 : i32
    return %arg0, %c0_i32 : i32, i32
  }
}

</mosaic_0001>

<llo_original>
// kernel: tpu_custom_call.1
$region0: #{tpu_custom_call.1}
  #allocation0 [shape = 'u32[]', space=smem, size = 0x4, offset = 0x4, fixed_abs, tag = 'smem constant byte address 0x4 - core index']
  #allocation1 [shape = 'u32[144,128]{1,0:T(1,128)}', space=vmem, size = 0x12000, scoped, tag = 'internal scratch']
  %s0 = inlined_call_operand.hbm [shape: f32[8,64], index: 0, kind: input, shape index: {}]
  %s1 = inlined_call_operand.hbm [shape: f32[8,32], index: 1, kind: input, shape index: {}]
  %s2 = inlined_call_operand.hbm [shape: f32[8,64], index: 2, kind: output, shape index: {}]
  %s3 = sld [smem:[#allocation0]]
  $region26: #{tpu_custom_call.1} parent=0
    _
  %s5 = ssub.s32 1, %s3
  %s6 = scalar_select 0, %s5, %s3
  $region1: #{tpu_custom_call.1} parent=0
    #allocation2 [shape = 'u8[4096]{0}', space=vmem, size = 0x1000, scoped, tag = 'input window, operand 0, single buffered']
    #allocation3 [shape = 's32[1]{0}', space=sflag, size = 0x4, scoped, tag = 'scoped memory for tpu_custom_call.1']
    #allocation4 [shape = 's32[1]{0}', space=sflag, size = 0x4, scoped, tag = 'scoped memory for tpu_custom_call.1']
    #allocation5 [shape = 'u8[4096]{0}', space=vmem, size = 0x1000, scoped, tag = 'input window, operand 1, single buffered']
    #allocation6 [shape = 's32[1]{0}', space=sflag, size = 0x4, scoped, tag = 'scoped memory for tpu_custom_call.1']
    #allocation7 [shape = 'u8[4096]{0}', space=vmem, size = 0x1000, scoped, tag = 'output window, operand 0, single buffered']
    %7 = vsyncpa [#allocation3], 0
    %8 = vsyncpa [#allocation6], 0
    %9 = vsyncpa [#allocation4], 0
    // Predicated region
    $region2: #{tpu_custom_call.1} parent=1 // pred_check
      _
    $region3: #{tpu_custom_call.1} parent=1 // pred_check_branch
      %11 = sbr.rel (0) target = $region5
    $region4: #{tpu_custom_call.1} parent=1 // pred_region
      %s13 = ssub.s32 128, 128
      %14 = vsyncadd [#allocation3], %s13
      %s16 = sshll.u32 [#allocation2], 4
      %s17 = int_to_ptr.vmem [resolvable:$true] %s16
      %19 = dma.hbm_to_vmem [thread:$0]  %s0, 128, %s17, [#allocation3]
    $region5: #{tpu_custom_call.1} parent=1 // pred_fallthru
      _
    // Predicated region
    $region6: #{tpu_custom_call.1} parent=1 // pred_check
      _
    $region7: #{tpu_custom_call.1} parent=1 // pred_check_branch
      %21 = sbr.rel (0) target = $region9
    $region8: #{tpu_custom_call.1} parent=1 // pred_region
      %s23 = ssub.s32 128, 128
      %24 = vsyncadd [#allocation6], %s23
      %s26 = sshll.u32 [#allocation5], 4
      %s27 = int_to_ptr.vmem [resolvable:$true] %s26
      %29 = dma.hbm_to_vmem [thread:$0]  %s1, 128, %s27, [#allocation6]
    $region9: #{tpu_custom_call.1} parent=1 // pred_fallthru
      _
    // Predicated region
    $region10: #{tpu_custom_call.1} parent=1 // pred_check
      _
    $region11: #{tpu_custom_call.1} parent=1 // pred_check_branch
      %31 = sbr.rel (0) target = $region13
    $region12: #{tpu_custom_call.1} parent=1 // pred_region
      %32 = dma.done [#allocation3], 128
    $region13: #{tpu_custom_call.1} parent=1 // pred_fallthru
      _
    // Predicated region
    $region14: #{tpu_custom_call.1} parent=1 // pred_check
      _
    $region15: #{tpu_custom_call.1} parent=1 // pred_check_branch
      %34 = sbr.rel (0) target = $region17
    $region16: #{tpu_custom_call.1} parent=1 // pred_region
      %35 = dma.done [#allocation6], 128
    $region17: #{tpu_custom_call.1} parent=1 // pred_fallthru
      _
    %v36 = vld [vmem:[#allocation5] sm:$0xff]
    %38 = vrot.lane.b32.xlu0 %v36, 32
    %v39 = vpop.permute.xlu0 %38
    %vm41 = vcmask 261120
    %v42 = vsel %vm41, %v36, %v39
    %v43 = vld [vmem:[#allocation2] sm:$0xff]
    %v44 = vadd.f32 %v43, %v42
    %vm45 = vcmask 523264
    %46 = vst.msk [vmem:[#allocation7] sm:$0xff] %vm45, %v44
    // Predicated region
    $region18: #{tpu_custom_call.1} parent=1 // pred_check
      _
    $region19: #{tpu_custom_call.1} parent=1 // pred_check_branch
      %48 = sbr.rel (0) target = $region21
    $region20: #{tpu_custom_call.1} parent=1 // pred_region
      %s50 = ssub.s32 128, 128
      %51 = vsyncadd [#allocation4], %s50
      %s53 = sshll.u32 [#allocation7], 4
      %s54 = int_to_ptr.vmem [resolvable:$true] %s53
      %56 = dma.vmem_to_hbm [thread:$0]  %s54, 128, %s2, [#allocation4]
    $region21: #{tpu_custom_call.1} parent=1 // pred_fallthru
      _
    // Predicated region
    $region22: #{tpu_custom_call.1} parent=1 // pred_check
      _
    $region23: #{tpu_custom_call.1} parent=1 // pred_check_branch
      %58 = sbr.rel (0) target = $region25
    $region24: #{tpu_custom_call.1} parent=1 // pred_region
      %59 = dma.done [#allocation4], 128
    $region25: #{tpu_custom_call.1} parent=1 // pred_fallthru
      _
    %60 = vsyncpa [#allocation3], 1
    %61 = vsyncpa [#allocation6], 1
    %62 = vsyncpa [#allocation4], 1

</llo_original>
